<compile_context>
chip_gen: v5e
topology: v5e:2x2
jax: 0.10.0
libtpu: 0.0.40
codegen_flags: <defaults>
</compile_context>

<pallas_src>
import functools
import math

import jax
import jax.numpy as jnp
from jax import lax
from jax.experimental import pallas as pl
from jax.experimental.pallas import tpu as pltpu

LANE = 128
F32 = jnp.float32
BF16 = jnp.bfloat16


def _round_up(v, m):
    return (v + m - 1) // m * m


def _epilogue(acc, b, res, gamma, beta, h_true, hp):
    """bias + ReLU + residual + LayerNorm(eps=1e-8) on one (rows, hp) slab."""
    # TODO(synk): training-mode dropout (pltpu.prng_random_bits mask); eval mode
    # dropout is identity so it is omitted here.
    h = jnp.maximum(acc + b, 0.0) + res
    inv_h = 1.0 / float(h_true)
    mean = jnp.sum(h, axis=-1, keepdims=True) * inv_h
    diff = h - mean
    if h_true != hp:
        # Padded lanes of h are exactly zero (zero-padded W/b/residual), so the
        # mean is already correct; only diff needs masking so (0 - mean) does
        # not pollute the variance.
        lane_mask = (lax.broadcasted_iota(jnp.int32, (1, hp), 1)
                     < h_true).astype(F32)
        diff = diff * lane_mask
    var = jnp.sum(diff * diff, axis=-1, keepdims=True) * inv_h
    normed = diff * lax.rsqrt(var + 1e-8)
    return normed * gamma + beta


# ----------------------------------------------------------------------------
# Fused small-graph kernel: XW, A@XW and the epilogue in one call.
# ----------------------------------------------------------------------------
def fused_kernel(a_ref, x_ref, w_ref, b_ref, g_ref, be_ref, o_ref, *, h_true):
    x = x_ref[...]                                   # f32 residual source
    xw = jnp.dot(x.astype(BF16), w_ref[...],
                 preferred_element_type=jnp.float32)
    agg = jnp.dot(a_ref[...], xw.astype(BF16),
                  preferred_element_type=jnp.float32)
    o_ref[...] = _epilogue(agg, b_ref[...], x, g_ref[...], be_ref[...],
                           h_true, o_ref.shape[-1])


# ----------------------------------------------------------------------------
# Tiled path, stage 1: XW = X @ W, computed once per node.
# ----------------------------------------------------------------------------
def project_kernel(x_ref, w_ref, xw_ref):
    xw = jnp.dot(x_ref[...], w_ref[...], preferred_element_type=jnp.float32)
    xw_ref[...] = xw.astype(xw_ref.dtype)


# ----------------------------------------------------------------------------
# Tiled path, stage 2: acc += A_tile @ XW_slab over nonzero k tiles only;
# on the last k step: bias / ReLU / residual / LayerNorm epilogue.
# ----------------------------------------------------------------------------
def aggregate_kernel(kt_ref, nnz_ref, a_ref, xw_ref, xres_ref, b_ref, g_ref,
                     be_ref, o_ref, acc_ref, *, h_true, tk, xw_resident):
    i = pl.program_id(0)
    j = pl.program_id(1)

    @pl.when(j == 0)
    def _():
        acc_ref[...] = jnp.zeros_like(acc_ref)

    # Skip MXU work for all-zero A tiles (DMA is already skipped because the
    # index_map repeats the previously fetched block for them).
    @pl.when(j < nnz_ref[i])
    def _():
        if xw_resident:
            kk = kt_ref[i, j]
            start = pl.multiple_of(kk * tk, LANE)
            xw = xw_ref[pl.ds(start, tk), :]
        else:
            xw = xw_ref[...]
        acc_ref[...] += jnp.dot(a_ref[...], xw,
                                preferred_element_type=jnp.float32)

    @pl.when(j == pl.num_programs(1) - 1)
    def _():
        o_ref[...] = _epilogue(acc_ref[...], b_ref[...], xres_ref[...],
                               g_ref[...], be_ref[...], h_true,
                               o_ref.shape[-1])


# ----------------------------------------------------------------------------
# Wrapper
# ----------------------------------------------------------------------------
def graph_conv_layer(x, a_norm, w, b, gamma, beta, *, tm=256, tk=512,
                     fused_max_nodes=256, xw_resident_max_bytes=16 << 20):
    """x: [N, H]; a_norm: [N, N] normalized adjacency; w: [H, H];
    b / gamma / beta: [1, H] (or [H])."""
    n, h = x.shape
    hp = _round_up(h, LANE)                          # lane-dense hidden dim

    # Zero-padded, lane-dense parameters (pads stay zero -> do not perturb
    # bias addition or LayerNorm statistics).
    w_bf = jnp.zeros((hp, hp), BF16).at[:h, :h].set(w.astype(BF16))
    b_pad = jnp.zeros((1, hp), F32).at[:, :h].set(jnp.reshape(b, (1, h)).astype(F32))
    g_pad = jnp.zeros((1, hp), F32).at[:, :h].set(jnp.reshape(gamma, (1, h)).astype(F32))
    be_pad = jnp.zeros((1, hp), F32).at[:, :h].set(jnp.reshape(beta, (1, h)).astype(F32))

    n_lane = _round_up(n, LANE)

    # ---- Small-graph fast path: one fused pallas_call ----------------------
    if n_lane <= fused_max_nodes:
        n_pad = n_lane
        x_pad = jnp.zeros((n_pad, hp), F32).at[:n, :h].set(x.astype(F32))
        a_bf = jnp.zeros((n_pad, n_pad), BF16).at[:n, :n].set(a_norm.astype(BF16))

        out_pad = pl.pallas_call(
            functools.partial(fused_kernel, h_true=h),
            out_shape=jax.ShapeDtypeStruct((n_pad, hp), F32),
            grid_spec=pltpu.PrefetchScalarGridSpec(
                num_scalar_prefetch=0,
                grid=(1,),
                in_specs=[
                    pl.BlockSpec((n_pad, n_pad), lambda i: (0, 0)),  # A (bf16)
                    pl.BlockSpec((n_pad, hp), lambda i: (0, 0)),     # X (f32)
                    pl.BlockSpec((hp, hp), lambda i: (0, 0)),        # W (bf16)
                    pl.BlockSpec((1, hp), lambda i: (0, 0)),         # bias
                    pl.BlockSpec((1, hp), lambda i: (0, 0)),         # gamma
                    pl.BlockSpec((1, hp), lambda i: (0, 0)),         # beta
                ],
                out_specs=pl.BlockSpec((n_pad, hp), lambda i: (0, 0)),
            ),
        )(a_bf, x_pad, w_bf, b_pad, g_pad, be_pad)
        return out_pad[:n, :h]

    # ---- Tiled path ---------------------------------------------------------
    tm = max(LANE, min(_round_up(tm, LANE), n_lane))
    tk = max(LANE, min(_round_up(tk, LANE), n_lane))
    n_pad = _round_up(n, (tm * tk) // math.gcd(tm, tk))
    n_row, n_k = n_pad // tm, n_pad // tk

    # Pad + cast directly into the dtypes the kernels consume (no f32 N^2
    # intermediate for A).
    x_res = jnp.zeros((n_pad, hp), F32).at[:n, :h].set(x.astype(F32))
    x_bf = jnp.zeros((n_pad, hp), BF16).at[:n, :h].set(x.astype(BF16))
    a_bf = jnp.zeros((n_pad, n_pad), BF16).at[:n, :n].set(a_norm.astype(BF16))

    # Per-row-tile table of nonzero k tiles (nonzero first, in ascending k;
    # trailing entries repeat the last nonzero tile so the pipeline re-uses the
    # already-fetched block -> no DMA, and the kernel skips the matmul).
    nz = jnp.any(a_bf.reshape(n_row, tm, n_k, tk) != 0, axis=(1, 3))
    nnz = jnp.sum(nz, axis=1, dtype=jnp.int32)                       # [n_row]
    order = jnp.argsort(jnp.logical_not(nz), axis=1).astype(jnp.int32)
    jidx = lax.broadcasted_iota(jnp.int32, (n_row, n_k), 1)
    last = jnp.take_along_axis(order, jnp.maximum(nnz - 1, 0)[:, None], axis=1)
    kt = jnp.where(jidx < nnz[:, None], order, last)                 # [n_row, n_k]

    # Stage 1: XW = X @ W once per node (never recomputed per A k-tile).
    xw = pl.pallas_call(
        project_kernel,
        out_shape=jax.ShapeDtypeStruct((n_pad, hp), BF16),
        grid_spec=pltpu.PrefetchScalarGridSpec(
            num_scalar_prefetch=0,
            grid=(n_row,),
            in_specs=[pl.BlockSpec((tm, hp), lambda i: (i, 0)),
                      pl.BlockSpec((hp, hp), lambda i: (0, 0))],
            out_specs=pl.BlockSpec((tm, hp), lambda i: (i, 0)),
        ),
        compiler_params=pltpu.CompilerParams(
            dimension_semantics=("parallel",)),
    )(x_bf, w_bf)

    # Stage 2: XW VMEM-resident when it fits (fetched once, sliced in-kernel);
    # otherwise stream (tk, hp) k-slabs.
    xw_bytes = n_pad * hp * 2
    xw_resident = (2 * xw_bytes) <= xw_resident_max_bytes
    if xw_resident:
        xw_spec = pl.BlockSpec((n_pad, hp), lambda i, k, kt_r, nnz_r: (0, 0))
    else:
        xw_spec = pl.BlockSpec((tk, hp), lambda i, k, kt_r, nnz_r: (kt_r[i, k], 0))

    step_bytes = (2 * tm * tk * 2                                   # A (2-buf)
                  + (2 * xw_bytes if xw_resident else 2 * tk * hp * 2)
                  + 2 * tm * hp * 4                                 # residual
                  + 2 * tm * hp * 4                                 # output
                  + tm * hp * 4                                     # accumulator
                  + 6 * hp * 4)                                     # b/gamma/beta
    # Safe on v7x (64 MiB physical VMEM) with headroom for pipelining.
    vmem_bytes = int(min(48 << 20, max(8 << 20, step_bytes + (2 << 20))))

    kernel = functools.partial(aggregate_kernel, h_true=h, tk=tk,
                               xw_resident=xw_resident)
    out_pad = pl.pallas_call(
        kernel,
        out_shape=jax.ShapeDtypeStruct((n_pad, hp), F32),
        grid_spec=pltpu.PrefetchScalarGridSpec(
            num_scalar_prefetch=2,
            grid=(n_row, n_k),
            in_specs=[
                pl.BlockSpec((tm, tk), lambda i, k, kt_r, nnz_r: (i, kt_r[i, k])),
                xw_spec,
                pl.BlockSpec((tm, hp), lambda i, k, kt_r, nnz_r: (i, 0)),
                pl.BlockSpec((1, hp), lambda i, k, kt_r, nnz_r: (0, 0)),
                pl.BlockSpec((1, hp), lambda i, k, kt_r, nnz_r: (0, 0)),
                pl.BlockSpec((1, hp), lambda i, k, kt_r, nnz_r: (0, 0)),
            ],
            out_specs=pl.BlockSpec((tm, hp), lambda i, k, kt_r, nnz_r: (i, 0)),
            scratch_shapes=[pltpu.VMEM((tm, hp), jnp.float32)],
        ),
        compiler_params=pltpu.CompilerParams(
            dimension_semantics=("parallel", "arbitrary"),
            vmem_limit_bytes=vmem_bytes),
    )(kt, nnz, a_bf, xw, x_res, b_pad, g_pad, be_pad)

    return out_pad[:n, :h]


def build_gcn_adjacency(edge_index, num_nodes):
    """Dense D^-1/2 (A + I) D^-1/2 matching PyG GCNConv defaults.

    edge_index: [2, E] int32, row = source, col = target.
    Returns A_norm [N, N] with A_norm[t, s] = norm(s -> t).
    """
    src, dst = edge_index[0], edge_index[1]
    loops = jnp.arange(num_nodes, dtype=src.dtype)
    src = jnp.concatenate([src, loops])
    dst = jnp.concatenate([dst, loops])
    a = jnp.zeros((num_nodes, num_nodes), jnp.float32).at[dst, src].add(1.0)
    deg = a.sum(axis=1)                          # in-degree (incl. self loop)
    dinv = jnp.where(deg > 0, 1.0 / jnp.sqrt(deg), 0.0)
    return dinv[:, None] * a * dinv[None, :]


def reference(x, a_norm, w, b, gamma, beta, eps=1e-8):
    """Pure-JAX f32 reference of the module forward (eval mode)."""
    h = jnp.maximum(a_norm @ (x @ w) + jnp.reshape(b, (1, -1)), 0.0) + x
    mean = jnp.mean(h, axis=-1, keepdims=True)
    var = jnp.mean((h - mean) ** 2, axis=-1, keepdims=True)
    return ((h - mean) * lax.rsqrt(var + eps) * jnp.reshape(gamma, (1, -1))
            + jnp.reshape(beta, (1, -1)))


if __name__ == "__main__":
    key = jax.random.PRNGKey(0)

    def run_case(n, h, e, case_key):
        kx, kw, ke1, ke2 = jax.random.split(case_key, 4)
        x = jax.random.normal(kx, (n, h), dtype=jnp.float32)
        src = jax.random.randint(ke1, (e,), 0, n, dtype=jnp.int32)
        dst = jax.random.randint(ke2, (e,), 0, n, dtype=jnp.int32)
        edge_index = jnp.stack([src, dst], axis=0)

        limit = jnp.sqrt(6.0 / (h + h))
        w = jax.random.uniform(kw, (h, h), jnp.float32, -limit, limit)
        b = jnp.zeros((1, h), jnp.float32)
        gamma = jnp.ones((1, h), jnp.float32)
        beta = jnp.zeros((1, h), jnp.float32)

        a_norm = build_gcn_adjacency(edge_index, n)
        out = graph_conv_layer(x, a_norm, w, b, gamma, beta)
        jax.block_until_ready(out)

        assert out.shape == (n, h) and out.dtype == jnp.float32
        assert bool(jnp.all(jnp.isfinite(out)))
        ref = reference(x, a_norm, w, b, gamma, beta)
        err = float(jnp.max(jnp.abs(out - ref)))
        assert err < 1e-1, f"max abs err {err}"   # bf16 MXU tolerance
        return err

    k1, k2 = jax.random.split(key)
    run_case(8, 32, 12, k1)      # fused small-graph path
    run_case(600, 64, 900, k2)   # tiled path: projection + sparse-aware aggregation
    print("KERNEL_OK")
</pallas_src>

<mosaic_0001>
module attributes {stable_mosaic.version = 11 : i64} {
  func.func @fused_kernel(%arg0: i32, %arg1: memref<128x128xbf16, #tpu.memory_space<vmem>>, %arg2: memref<128x128xf32, #tpu.memory_space<vmem>>, %arg3: memref<128x128xbf16, #tpu.memory_space<vmem>>, %arg4: memref<1x128xf32, #tpu.memory_space<vmem>>, %arg5: memref<1x128xf32, #tpu.memory_space<vmem>>, %arg6: memref<1x128xf32, #tpu.memory_space<vmem>>, %arg7: memref<128x128xf32, #tpu.memory_space<vmem>>) attributes {dimension_semantics = [#tpu.dimension_semantics<arbitrary>], iteration_bounds = array<i64: 1>, scalar_prefetch = 0 : i64, scratch_operands = 0 : i64, tpu.core_type = #tpu.core_type<tc>, window_params = [{pipeline_mode = #tpu.pipeline_mode<synchronous>, transform_indices = @transform_0, window_bounds = array<i64: 128, 128>}, {pipeline_mode = #tpu.pipeline_mode<synchronous>, transform_indices = @transform_1, window_bounds = array<i64: 128, 128>}, {pipeline_mode = #tpu.pipeline_mode<synchronous>, transform_indices = @transform_2, window_bounds = array<i64: 128, 128>}, {pipeline_mode = #tpu.pipeline_mode<synchronous>, transform_indices = @transform_3, window_bounds = array<i64: 1, 128>}, {pipeline_mode = #tpu.pipeline_mode<synchronous>, transform_indices = @transform_4, window_bounds = array<i64: 1, 128>}, {pipeline_mode = #tpu.pipeline_mode<synchronous>, transform_indices = @transform_5, window_bounds = array<i64: 1, 128>}, {pipeline_mode = #tpu.pipeline_mode<synchronous>, transform_indices = @transform_6, window_bounds = array<i64: 128, 128>}]} {
    %c0 = arith.constant 0 : index
    %c0_0 = arith.constant 0 : index
    %0 = vector.load %arg2[%c0, %c0_0] : memref<128x128xf32, #tpu.memory_space<vmem>>, vector<128x128xf32>
    %1 = arith.truncf %0 : vector<128x128xf32> to vector<128x128xbf16>
    %c0_1 = arith.constant 0 : index
    %c0_2 = arith.constant 0 : index
    %2 = vector.load %arg3[%c0_1, %c0_2] : memref<128x128xbf16, #tpu.memory_space<vmem>>, vector<128x128xbf16>
    %cst = arith.constant dense<0.000000e+00> : vector<128x128xf32>
    %3 = tpu.matmul %1, %2, %cst {dimension_numbers = #tpu.dot_dimension_numbers<[1], [0], [0], [1], [0, 0, 1, 1], [], []>} : vector<128x128xbf16>, vector<128x128xbf16>, vector<128x128xf32> -> vector<128x128xf32>
    %c0_3 = arith.constant 0 : index
    %c0_4 = arith.constant 0 : index
    %4 = vector.load %arg1[%c0_3, %c0_4] : memref<128x128xbf16, #tpu.memory_space<vmem>>, vector<128x128xbf16>
    %5 = arith.truncf %3 : vector<128x128xf32> to vector<128x128xbf16>
    %cst_5 = arith.constant dense<0.000000e+00> : vector<128x128xf32>
    %6 = tpu.matmul %4, %5, %cst_5 {dimension_numbers = #tpu.dot_dimension_numbers<[1], [0], [0], [1], [0, 0, 1, 1], [], []>} : vector<128x128xbf16>, vector<128x128xbf16>, vector<128x128xf32> -> vector<128x128xf32>
    %c0_6 = arith.constant 0 : index
    %c0_7 = arith.constant 0 : index
    %7 = vector.load %arg4[%c0_6, %c0_7] : memref<1x128xf32, #tpu.memory_space<vmem>>, vector<1x128xf32>
    %c0_8 = arith.constant 0 : index
    %c0_9 = arith.constant 0 : index
    %8 = vector.load %arg5[%c0_8, %c0_9] : memref<1x128xf32, #tpu.memory_space<vmem>>, vector<1x128xf32>
    %c0_10 = arith.constant 0 : index
    %c0_11 = arith.constant 0 : index
    %9 = vector.load %arg6[%c0_10, %c0_11] : memref<1x128xf32, #tpu.memory_space<vmem>>, vector<1x128xf32>
    %10 = vector.broadcast %7 : vector<1x128xf32> to vector<128x128xf32>
    %11 = arith.addf %6, %10 : vector<128x128xf32>
    %cst_12 = arith.constant 0.000000e+00 : f32
    %12 = vector.broadcast %cst_12 : f32 to vector<128x128xf32>
    %13 = arith.maximumf %11, %12 : vector<128x128xf32>
    %14 = arith.addf %13, %0 : vector<128x128xf32>
    %cst_13 = arith.constant dense<0.000000e+00> : vector<128xf32>
    %15 = vector.multi_reduction <add>, %14, %cst_13 [1] : vector<128x128xf32> to vector<128xf32>
    %16 = vector.shape_cast %15 : vector<128xf32> to vector<128x1xf32>
    %cst_14 = arith.constant 3.125000e-02 : f32
    %17 = vector.broadcast %cst_14 : f32 to vector<128x1xf32>
    %18 = arith.mulf %16, %17 : vector<128x1xf32>
    %19 = vector.broadcast %18 : vector<128x1xf32> to vector<128x128xf32>
    %20 = arith.subf %14, %19 : vector<128x128xf32>
    %21 = tpu.iota {dimensions = array<i32: 1>} : vector<1x128xi32>
    %c32_i32 = arith.constant 32 : i32
    %22 = vector.broadcast %c32_i32 : i32 to vector<1x128xi32>
    %23 = arith.cmpi slt, %21, %22 : vector<1x128xi32>
    %24 = arith.extui %23 : vector<1x128xi1> to vector<1x128xi32>
    %25 = arith.sitofp %24 : vector<1x128xi32> to vector<1x128xf32>
    %26 = vector.broadcast %25 : vector<1x128xf32> to vector<128x128xf32>
    %27 = arith.mulf %20, %26 : vector<128x128xf32>
    %28 = arith.mulf %27, %27 : vector<128x128xf32>
    %cst_15 = arith.constant dense<0.000000e+00> : vector<128xf32>
    %29 = vector.multi_reduction <add>, %28, %cst_15 [1] : vector<128x128xf32> to vector<128xf32>
    %30 = vector.shape_cast %29 : vector<128xf32> to vector<128x1xf32>
    %cst_16 = arith.constant 3.125000e-02 : f32
    %31 = vector.broadcast %cst_16 : f32 to vector<128x1xf32>
    %32 = arith.mulf %30, %31 : vector<128x1xf32>
    %cst_17 = arith.constant 9.99999993E-9 : f32
    %33 = vector.broadcast %cst_17 : f32 to vector<128x1xf32>
    %34 = arith.addf %32, %33 : vector<128x1xf32>
    %35 = math.rsqrt %34 : vector<128x1xf32>
    %36 = vector.broadcast %35 : vector<128x1xf32> to vector<128x128xf32>
    %37 = arith.mulf %27, %36 : vector<128x128xf32>
    %38 = vector.broadcast %8 : vector<1x128xf32> to vector<128x128xf32>
    %39 = arith.mulf %37, %38 : vector<128x128xf32>
    %40 = vector.broadcast %9 : vector<1x128xf32> to vector<128x128xf32>
    %41 = arith.addf %39, %40 : vector<128x128xf32>
    %c0_18 = arith.constant 0 : index
    %c0_19 = arith.constant 0 : index
    %42 = vector.load %arg7[%c0_18, %c0_19] : memref<128x128xf32, #tpu.memory_space<vmem>>, vector<128x128xf32>
    tpu.vector_store %arg7[%c0_18, %c0_19], %41 {strides = array<i32>} : memref<128x128xf32, #tpu.memory_space<vmem>>, vector<128x128xf32>,
    return
  }
  func.func @transform_0(%arg0: i32) -> (i32, i32) {
    %c0_i32 = arith.constant 0 : i32
    %c0_i32_0 = arith.constant 0 : i32
    %c0_i32_1 = arith.constant 0 : i32
    return %c0_i32, %c0_i32_0 : i32, i32
  }
  func.func @transform_1(%arg0: i32) -> (i32, i32) {
    %c0_i32 = arith.constant 0 : i32
    %c0_i32_0 = arith.constant 0 : i32
    %c0_i32_1 = arith.constant 0 : i32
    return %c0_i32, %c0_i32_0 : i32, i32
  }
  func.func @transform_2(%arg0: i32) -> (i32, i32) {
    %c0_i32 = arith.constant 0 : i32
    %c0_i32_0 = arith.constant 0 : i32
    %c0_i32_1 = arith.constant 0 : i32
    return %c0_i32, %c0_i32_0 : i32, i32
  }
  func.func @transform_3(%arg0: i32) -> (i32, i32) {
    %c0_i32 = arith.constant 0 : i32
    %c0_i32_0 = arith.constant 0 : i32
    %c0_i32_1 = arith.constant 0 : i32
    return %c0_i32, %c0_i32_0 : i32, i32
  }
  func.func @transform_4(%arg0: i32) -> (i32, i32) {
    %c0_i32 = arith.constant 0 : i32
    %c0_i32_0 = arith.constant 0 : i32
    %c0_i32_1 = arith.constant 0 : i32
    return %c0_i32, %c0_i32_0 : i32, i32
  }
  func.func @transform_5(%arg0: i32) -> (i32, i32) {
    %c0_i32 = arith.constant 0 : i32
    %c0_i32_0 = arith.constant 0 : i32
    %c0_i32_1 = arith.constant 0 : i32
    return %c0_i32, %c0_i32_0 : i32, i32
  }
  func.func @transform_6(%arg0: i32) -> (i32, i32) {
    %c0_i32 = arith.constant 0 : i32
    %c0_i32_0 = arith.constant 0 : i32
    %c0_i32_1 = arith.constant 0 : i32
    return %c0_i32, %c0_i32_0 : i32, i32
  }
}

</mosaic_0001>

<llo_original>
// kernel: tpu_custom_call.1
$region0: #{tpu_custom_call.1}
  #allocation0 [shape = 'u32[]', space=smem, size = 0x4, offset = 0x4, fixed_abs, tag = 'smem constant byte address 0x4 - core index']
  #allocation1 [shape = 'u32[72,128]{1,0:T(1,128)}', space=vmem, size = 0x9000, scoped, tag = 'internal scratch']
  %s0 = inlined_call_operand.hbm [shape: bf16[128,128], index: 0, kind: input, shape index: {}]
  %s1 = inlined_call_operand.hbm [shape: f32[128,128], index: 1, kind: input, shape index: {}]
  %s2 = inlined_call_operand.hbm [shape: bf16[128,128], index: 2, kind: input, shape index: {}]
  %s3 = inlined_call_operand.vmem [shape: f32[1,128], index: 3, kind: input, shape index: {}]
  %s4 = inlined_call_operand.vmem [shape: f32[1,128], index: 4, kind: input, shape index: {}]
  %s5 = inlined_call_operand.vmem [shape: f32[1,128], index: 5, kind: input, shape index: {}]
  %s6 = inlined_call_operand.hbm [shape: f32[128,128], index: 6, kind: output, shape index: {}]
  %s7 = sld [smem:[#allocation0]]
  $region46: #{tpu_custom_call.1} parent=0
    _
  %s9 = ssub.s32 1, %s7
  %s10 = scalar_select 0, %s9, %s7
  $region1: #{tpu_custom_call.1} parent=0
    #allocation2 [shape = 'u8[32768]{0}', space=vmem, size = 0x8000, scoped, tag = 'input window, operand 0, single buffered']
    #allocation3 [shape = 's32[1]{0}', space=sflag, size = 0x4, scoped, tag = 'scoped memory for tpu_custom_call.1']
    #allocation4 [shape = 's32[1]{0}', space=sflag, size = 0x4, scoped, tag = 'scoped memory for tpu_custom_call.1']
    #allocation5 [shape = 'u8[65536]{0}', space=vmem, size = 0x10000, scoped, tag = 'input window, operand 1, single buffered']
    #allocation6 [shape = 's32[1]{0}', space=sflag, size = 0x4, scoped, tag = 'scoped memory for tpu_custom_call.1']
    #allocation7 [shape = 'u8[32768]{0}', space=vmem, size = 0x8000, scoped, tag = 'input window, operand 2, single buffered']
    #allocation8 [shape = 'u8[65536]{0}', space=vmem, size = 0x10000, scoped, tag = 'output window, operand 0, single buffered']
    %11 = vsyncpa [#allocation3], 0
    %12 = vsyncpa [#allocation6], 0
    %13 = vsyncpa [#allocation4], 0
    // Predicated region
    $region2: #{tpu_custom_call.1} parent=1 // pred_check
      _
    $region3: #{tpu_custom_call.1} parent=1 // pred_check_branch
      %15 = sbr.rel (0) target = $region5
    $region4: #{tpu_custom_call.1} parent=1 // pred_region
      %17 = vsyncadd [#allocation3], 0
      %s18 = sshll.u32 %s0, 4
      %s19 = int_to_ptr.hbm [resolvable:$true] %s18
      %s20 = sshll.u32 [#allocation2], 4
      %s21 = int_to_ptr.vmem [resolvable:$true] %s20
      %26 = dma.hbm_to_vmem [thread:$0]  %s19, 1024, %s21, [#allocation3], 64, 64, 4
    $region5: #{tpu_custom_call.1} parent=1 // pred_fallthru
      _
    // Predicated region
    $region6: #{tpu_custom_call.1} parent=1 // pred_check
      _
    $region7: #{tpu_custom_call.1} parent=1 // pred_check_branch
      %28 = sbr.rel (0) target = $region9
    $region8: #{tpu_custom_call.1} parent=1 // pred_region
      %30 = vsyncadd [#allocation6], 0
      %s31 = sshll.u32 %s1, 4
      %s32 = int_to_ptr.hbm [resolvable:$true] %s31
      %s33 = sshll.u32 [#allocation5], 4
      %s34 = int_to_ptr.vmem [resolvable:$true] %s33
      %39 = dma.hbm_to_vmem [thread:$0]  %s32, 2048, %s34, [#allocation6], 128, 128, 8
    $region9: #{tpu_custom_call.1} parent=1 // pred_fallthru
      _
    // Predicated region
    $region10: #{tpu_custom_call.1} parent=1 // pred_check
      _
    $region11: #{tpu_custom_call.1} parent=1 // pred_check_branch
      %41 = sbr.rel (0) target = $region13
    $region12: #{tpu_custom_call.1} parent=1 // pred_region
      %43 = vsyncadd [#allocation6], 0
      %s44 = sshll.u32 %s2, 4
      %s45 = int_to_ptr.hbm [resolvable:$true] %s44
      %s46 = sshll.u32 [#allocation7], 4
      %s47 = int_to_ptr.vmem [resolvable:$true] %s46
      %52 = dma.hbm_to_vmem [thread:$0]  %s45, 1024, %s47, [#allocation6], 64, 64, 4
    $region13: #{tpu_custom_call.1} parent=1 // pred_fallthru
      _
    // Predicated region
    $region14: #{tpu_custom_call.1} parent=1 // pred_check
      _
    $region15: #{tpu_custom_call.1} parent=1 // pred_check_branch
      %54 = sbr.rel (0) target = $region17
    $region16: #{tpu_custom_call.1} parent=1 // pred_region
      _
    $region17: #{tpu_custom_call.1} parent=1 // pred_fallthru
      _
    // Predicated region
    $region18: #{tpu_custom_call.1} parent=1 // pred_check
      _
    $region19: #{tpu_custom_call.1} parent=1 // pred_check_branch
      %56 = sbr.rel (0) target = $region21
    $region20: #{tpu_custom_call.1} parent=1 // pred_region
      _
    $region21: #{tpu_custom_call.1} parent=1 // pred_fallthru
      _
    // Predicated region
    $region22: #{tpu_custom_call.1} parent=1 // pred_check
      _
    $region23: #{tpu_custom_call.1} parent=1 // pred_check_branch
      %58 = sbr.rel (0) target = $region25
    $region24: #{tpu_custom_call.1} parent=1 // pred_region
      _
    $region25: #{tpu_custom_call.1} parent=1 // pred_fallthru
      _
    // Predicated region
    $region26: #{tpu_custom_call.1} parent=1 // pred_check
      _
    $region27: #{tpu_custom_call.1} parent=1 // pred_check_branch
      %60 = sbr.rel (0) target = $region29
    $region28: #{tpu_custom_call.1} parent=1 // pred_region
      %62 = dma.done [#allocation3], 1024
    $region29: #{tpu_custom_call.1} parent=1 // pred_fallthru
      _
    // Predicated region
    $region30: #{tpu_custom_call.1} parent=1 // pred_check
      _
    $region31: #{tpu_custom_call.1} parent=1 // pred_check_branch
      %64 = sbr.rel (0) target = $region33
    $region32: #{tpu_custom_call.1} parent=1 // pred_region
      %66 = dma.done [#allocation6], 2048
    $region33: #{tpu_custom_call.1} parent=1 // pred_fallthru
      _
    // Predicated region
    $region34: #{tpu_custom_call.1} parent=1 // pred_check
      _
    $region35: #{tpu_custom_call.1} parent=1 // pred_check_branch
      %68 = sbr.rel (0) target = $region37
    $region36: #{tpu_custom_call.1} parent=1 // pred_region
      %70 = dma.done [#allocation6], 1024
    $region37: #{tpu_custom_call.1} parent=1 // pred_fallthru
      _
    %v71 = vld [vmem:[#allocation5] sm:$0xff]
    %v72 = vld [vmem:[#allocation5 + $0x8] sm:$0xff]
    %v73 = vld [vmem:[#allocation5 + $0x10] sm:$0xff]
    %v74 = vld [vmem:[#allocation5 + $0x18] sm:$0xff]
    %v75 = vld [vmem:[#allocation5 + $0x20] sm:$0xff]
    %v76 = vld [vmem:[#allocation5 + $0x28] sm:$0xff]
    %v77 = vld [vmem:[#allocation5 + $0x30] sm:$0xff]
    %v78 = vld [vmem:[#allocation5 + $0x38] sm:$0xff]
    %v79 = vld [vmem:[#allocation5 + $0x40] sm:$0xff]
    %v80 = vld [vmem:[#allocation5 + $0x48] sm:$0xff]
    %v81 = vld [vmem:[#allocation5 + $0x50] sm:$0xff]
    %v82 = vld [vmem:[#allocation5 + $0x58] sm:$0xff]
    %v83 = vld [vmem:[#allocation5 + $0x60] sm:$0xff]
    %v84 = vld [vmem:[#allocation5 + $0x68] sm:$0xff]
    %v85 = vld [vmem:[#allocation5 + $0x70] sm:$0xff]
    %v86 = vld [vmem:[#allocation5 + $0x78] sm:$0xff]
    %v87 = vpack.c.bf16 %v72, %v71
    %v88 = vpack.c.bf16 %v74, %v73
    %v89 = vpack.c.bf16 %v76, %v75
    %v90 = vpack.c.bf16 %v78, %v77
    %v91 = vpack.c.bf16 %v80, %v79
    %v92 = vpack.c.bf16 %v82, %v81
    %v93 = vpack.c.bf16 %v84, %v83
    %v94 = vpack.c.bf16 %v86, %v85
    %v95 = vld [vmem:[#allocation7] sm:$0xf]
    %v96 = vld [vmem:[#allocation7 + $0x4] sm:$0xf]
    %v97 = vld [vmem:[#allocation7 + $0x8] sm:$0xf]
    %v98 = vld [vmem:[#allocation7 + $0xc] sm:$0xf]
    %v99 = vld [vmem:[#allocation7 + $0x10] sm:$0xf]
    %v100 = vld [vmem:[#allocation7 + $0x14] sm:$0xf]
    %v101 = vld [vmem:[#allocation7 + $0x18] sm:$0xf]
    %v102 = vld [vmem:[#allocation7 + $0x1c] sm:$0xf]
    %v103 = vld [vmem:[#allocation7 + $0x20] sm:$0xf]
    %v104 = vld [vmem:[#allocation7 + $0x24] sm:$0xf]
    %v105 = vld [vmem:[#allocation7 + $0x28] sm:$0xf]
    %v106 = vld [vmem:[#allocation7 + $0x2c] sm:$0xf]
    %v107 = vld [vmem:[#allocation7 + $0x30] sm:$0xf]
    %v108 = vld [vmem:[#allocation7 + $0x34] sm:$0xf]
    %v109 = vld [vmem:[#allocation7 + $0x38] sm:$0xf]
    %v110 = vld [vmem:[#allocation7 + $0x3c] sm:$0xf]
    %v127 = vunpack.c.l.b16 %v95
    %v128 = vunpack.c.l.b16 %v96
    %v129 = vunpack.c.l.b16 %v97
    %v130 = vunpack.c.l.b16 %v98
    %v131 = vunpack.c.l.b16 %v99
    %v132 = vunpack.c.l.b16 %v100
    %v133 = vunpack.c.l.b16 %v101
    %v134 = vunpack.c.l.b16 %v102
    %v135 = vunpack.c.l.b16 %v103
    %v136 = vunpack.c.l.b16 %v104
    %v137 = vunpack.c.l.b16 %v105
    %v138 = vunpack.c.l.b16 %v106
    %v139 = vunpack.c.l.b16 %v107
    %v140 = vunpack.c.l.b16 %v108
    %v141 = vunpack.c.l.b16 %v109
    %v142 = vunpack.c.l.b16 %v110
    %v143 = vpack.c.b16 %v128, %v127
    %v144 = vpack.c.b16 %v130, %v129
    %v145 = vpack.c.b16 %v132, %v131
    %v146 = vpack.c.b16 %v134, %v133
    %v147 = vpack.c.b16 %v136, %v135
    %v148 = vpack.c.b16 %v138, %v137
    %v149 = vpack.c.b16 %v140, %v139
    %v150 = vpack.c.b16 %v142, %v141
    %159 = vmatpush.bf16.msra.mxu0 %v150
    %160 = vmatpush.bf16.msra.mxu0 %v149
    %161 = vmatpush.bf16.msra.mxu0 %v148
    %162 = vmatpush.bf16.msra.mxu0 %v147
    %163 = vmatpush.bf16.msra.mxu0 %v146
    %164 = vmatpush.bf16.msra.mxu0 %v145
    %165 = vmatpush.bf16.msra.mxu0 %v144
    %166 = vmatpush.bf16.msra.mxu0 %v143
    %167 = vmatmul.bf16.gmra.mxu0 %v87
    %v168 = vpop.f32.mrf.mxu0
    %v169 = vadd.f32 0.0, %v168
    %v170 = vpop.f32.mrf.mxu0
    %v171 = vadd.f32 0.0, %v170
    %172 = vmatmul.bf16.gmra.mxu0 %v88
    %v173 = vpop.f32.mrf.mxu0
    %v174 = vadd.f32 0.0, %v173
    %v175 = vpop.f32.mrf.mxu0
    %v176 = vadd.f32 0.0, %v175
    %177 = vmatmul.bf16.gmra.mxu0 %v89
    %v178 = vpop.f32.mrf.mxu0
    %v179 = vadd.f32 0.0, %v178
    %v180 = vpop.f32.mrf.mxu0
    %v181 = vadd.f32 0.0, %v180
    %182 = vmatmul.bf16.gmra.mxu0 %v90
    %v183 = vpop.f32.mrf.mxu0
    %v184 = vadd.f32 0.0, %v183
    %v185 = vpop.f32.mrf.mxu0
    %v186 = vadd.f32 0.0, %v185
    %187 = vmatmul.bf16.gmra.mxu0 %v91
    %v188 = vpop.f32.mrf.mxu0
    %v189 = vadd.f32 0.0, %v188
    %v190 = vpop.f32.mrf.mxu0
    %v191 = vadd.f32 0.0, %v190
    %192 = vmatmul.bf16.gmra.mxu0 %v92
    %v193 = vpop.f32.mrf.mxu0
    %v194 = vadd.f32 0.0, %v193
    %v195 = vpop.f32.mrf.mxu0
    %v196 = vadd.f32 0.0, %v195
    %197 = vmatmul.bf16.gmra.mxu0 %v93
    %v198 = vpop.f32.mrf.mxu0
    %v199 = vadd.f32 0.0, %v198
    %v200 = vpop.f32.mrf.mxu0
    %v201 = vadd.f32 0.0, %v200
    %202 = vmatmul.bf16.gmra.mxu0 %v94
    %v203 = vpop.f32.mrf.mxu0
    %v204 = vadd.f32 0.0, %v203
    %v205 = vpop.f32.mrf.mxu0
    %v206 = vadd.f32 0.0, %v205
    %207 = vdwg.mxu0
    %v208 = vld [vmem:[#allocation2] sm:$0xf]
    %v209 = vld [vmem:[#allocation2 + $0x4] sm:$0xf]
    %v210 = vld [vmem:[#allocation2 + $0x8] sm:$0xf]
    %v211 = vld [vmem:[#allocation2 + $0xc] sm:$0xf]
    %v212 = vld [vmem:[#allocation2 + $0x10] sm:$0xf]
    %v213 = vld [vmem:[#allocation2 + $0x14] sm:$0xf]
    %v214 = vld [vmem:[#allocation2 + $0x18] sm:$0xf]
    %v215 = vld [vmem:[#allocation2 + $0x1c] sm:$0xf]
    %v216 = vld [vmem:[#allocation2 + $0x20] sm:$0xf]
    %v217 = vld [vmem:[#allocation2 + $0x24] sm:$0xf]
    %v218 = vld [vmem:[#allocation2 + $0x28] sm:$0xf]
    %v219 = vld [vmem:[#allocation2 + $0x2c] sm:$0xf]
    %v220 = vld [vmem:[#allocation2 + $0x30] sm:$0xf]
    %v221 = vld [vmem:[#allocation2 + $0x34] sm:$0xf]
    %v222 = vld [vmem:[#allocation2 + $0x38] sm:$0xf]
    %v223 = vld [vmem:[#allocation2 + $0x3c] sm:$0xf]
    %v224 = vpack.c.bf16 %v171, %v169
    %v225 = vpack.c.bf16 %v176, %v174
    %v226 = vpack.c.bf16 %v181, %v179
    %v227 = vpack.c.bf16 %v186, %v184
    %v228 = vpack.c.bf16 %v191, %v189
    %v229 = vpack.c.bf16 %v196, %v194
    %v230 = vpack.c.bf16 %v201, %v199
    %v231 = vpack.c.bf16 %v206, %v204
    %v232 = vld [vmem:[%s3] sm:$0x1]
    %v233 = vld [vmem:[%s4] sm:$0x1]
    %v234 = vld [vmem:[%s5] sm:$0x1]
    %v236 = vperm.slane %v232, 0
    %v254 = vunpack.c.l.b16 %v208
    %v255 = vunpack.c.l.b16 %v209
    %v256 = vunpack.c.l.b16 %v210
    %v257 = vunpack.c.l.b16 %v211
    %v258 = vunpack.c.l.b16 %v212
    %v259 = vunpack.c.l.b16 %v213
    %v260 = vunpack.c.l.b16 %v214
    %v261 = vunpack.c.l.b16 %v215
    %v262 = vunpack.c.l.b16 %v216
    %v263 = vunpack.c.l.b16 %v217
    %v264 = vunpack.c.l.b16 %v218
    %v265 = vunpack.c.l.b16 %v219
    %v266 = vunpack.c.l.b16 %v220
    %v267 = vunpack.c.l.b16 %v221
    %v268 = vunpack.c.l.b16 %v222
    %v269 = vunpack.c.l.b16 %v223
    %v270 = vpack.c.b16 %v255, %v254
    %v271 = vpack.c.b16 %v257, %v256
    %v272 = vpack.c.b16 %v259, %v258
    %v273 = vpack.c.b16 %v261, %v260
    %v274 = vpack.c.b16 %v263, %v262
    %v275 = vpack.c.b16 %v265, %v264
    %v276 = vpack.c.b16 %v267, %v266
    %v277 = vpack.c.b16 %v269, %v268
    %286 = vmatpush.bf16.msra.mxu0 %v231
    %287 = vmatpush.bf16.msra.mxu0 %v230
    %288 = vmatpush.bf16.msra.mxu0 %v229
    %289 = vmatpush.bf16.msra.mxu0 %v228
    %290 = vmatpush.bf16.msra.mxu0 %v227
    %291 = vmatpush.bf16.msra.mxu0 %v226
    %292 = vmatpush.bf16.msra.mxu0 %v225
    %293 = vmatpush.bf16.msra.mxu0 %v224
    %294 = vmatmul.bf16.gmra.mxu0 %v270
    %v295 = vpop.f32.mrf.mxu0
    %v296 = vadd.f32 %v236, %v295
    %v297 = vpop.f32.mrf.mxu0
    %v298 = vadd.f32 %v236, %v297
    %299 = vmatmul.bf16.gmra.mxu0 %v271
    %v300 = vpop.f32.mrf.mxu0
    %v301 = vadd.f32 %v236, %v300
    %v302 = vpop.f32.mrf.mxu0
    %v303 = vadd.f32 %v236, %v302
    %304 = vmatmul.bf16.gmra.mxu0 %v272
    %v305 = vpop.f32.mrf.mxu0
    %v306 = vadd.f32 %v236, %v305
    %v307 = vpop.f32.mrf.mxu0
    %v308 = vadd.f32 %v236, %v307
    %309 = vmatmul.bf16.gmra.mxu0 %v273
    %v310 = vpop.f32.mrf.mxu0
    %v311 = vadd.f32 %v236, %v310
    %v312 = vpop.f32.mrf.mxu0
    %v313 = vadd.f32 %v236, %v312
    %314 = vmatmul.bf16.gmra.mxu0 %v274
    %v315 = vpop.f32.mrf.mxu0
    %v316 = vadd.f32 %v236, %v315
    %v317 = vpop.f32.mrf.mxu0
    %v318 = vadd.f32 %v236, %v317
    %319 = vmatmul.bf16.gmra.mxu0 %v275
    %v320 = vpop.f32.mrf.mxu0
    %v321 = vadd.f32 %v236, %v320
    %v322 = vpop.f32.mrf.mxu0
    %v323 = vadd.f32 %v236, %v322
    %324 = vmatmul.bf16.gmra.mxu0 %v276
    %v325 = vpop.f32.mrf.mxu0
    %v326 = vadd.f32 %v236, %v325
    %v327 = vpop.f32.mrf.mxu0
    %v328 = vadd.f32 %v236, %v327
    %329 = vmatmul.bf16.gmra.mxu0 %v277
    %v330 = vpop.f32.mrf.mxu0
    %v331 = vadd.f32 %v236, %v330
    %v332 = vpop.f32.mrf.mxu0
    %v333 = vadd.f32 %v236, %v332
    %334 = vdwg.mxu0
    %v335 = vmax.f32 %v296, 0.0
    %v336 = vmax.f32 %v298, 0.0
    %v337 = vmax.f32 %v301, 0.0
    %v338 = vmax.f32 %v303, 0.0
    %v339 = vmax.f32 %v306, 0.0
    %v340 = vmax.f32 %v308, 0.0
    %v341 = vmax.f32 %v311, 0.0
    %v342 = vmax.f32 %v313, 0.0
    %v343 = vmax.f32 %v316, 0.0
    %v344 = vmax.f32 %v318, 0.0
    %v345 = vmax.f32 %v321, 0.0
    %v346 = vmax.f32 %v323, 0.0
    %v347 = vmax.f32 %v326, 0.0
    %v348 = vmax.f32 %v328, 0.0
    %v349 = vmax.f32 %v331, 0.0
    %v350 = vmax.f32 %v333, 0.0
    %v351 = vadd.f32 %v335, %v71
    %v352 = vadd.f32 %v336, %v72
    %v353 = vadd.f32 %v337, %v73
    %v354 = vadd.f32 %v338, %v74
    %v355 = vadd.f32 %v339, %v75
    %v356 = vadd.f32 %v340, %v76
    %v357 = vadd.f32 %v341, %v77
    %v358 = vadd.f32 %v342, %v78
    %v359 = vadd.f32 %v343, %v79
    %v360 = vadd.f32 %v344, %v80
    %v361 = vadd.f32 %v345, %v81
    %v362 = vadd.f32 %v346, %v82
    %v363 = vadd.f32 %v347, %v83
    %v364 = vadd.f32 %v348, %v84
    %v365 = vadd.f32 %v349, %v85
    %v366 = vadd.f32 %v350, %v86
    %367 = vadd.xlane.f32.xlu0 %v351
    %v368 = vpop.xlane.xlu0 %367
    %369 = vadd.xlane.f32.xlu0 %v352
    %v370 = vpop.xlane.xlu0 %369
    %371 = vadd.xlane.f32.xlu0 %v353
    %v372 = vpop.xlane.xlu0 %371
    %373 = vadd.xlane.f32.xlu0 %v354
    %v374 = vpop.xlane.xlu0 %373
    %375 = vadd.xlane.f32.xlu0 %v355
    %v376 = vpop.xlane.xlu0 %375
    %377 = vadd.xlane.f32.xlu0 %v356
    %v378 = vpop.xlane.xlu0 %377
    %379 = vadd.xlane.f32.xlu0 %v357
    %v380 = vpop.xlane.xlu0 %379
    %381 = vadd.xlane.f32.xlu0 %v358
    %v382 = vpop.xlane.xlu0 %381
    %383 = vadd.xlane.f32.xlu0 %v359
    %v384 = vpop.xlane.xlu0 %383
    %385 = vadd.xlane.f32.xlu0 %v360
    %v386 = vpop.xlane.xlu0 %385
    %387 = vadd.xlane.f32.xlu0 %v361
    %v388 = vpop.xlane.xlu0 %387
    %389 = vadd.xlane.f32.xlu0 %v362
    %v390 = vpop.xlane.xlu0 %389
    %391 = vadd.xlane.f32.xlu0 %v363
    %v392 = vpop.xlane.xlu0 %391
    %393 = vadd.xlane.f32.xlu0 %v364
    %v394 = vpop.xlane.xlu0 %393
    %395 = vadd.xlane.f32.xlu0 %v365
    %v396 = vpop.xlane.xlu0 %395
    %397 = vadd.xlane.f32.xlu0 %v366
    %v398 = vpop.xlane.xlu0 %397
    %v399 = vmul.f32 %v368, 0.03125
    %v400 = vmul.f32 %v370, 0.03125
    %v401 = vmul.f32 %v372, 0.03125
    %v402 = vmul.f32 %v374, 0.03125
    %v403 = vmul.f32 %v376, 0.03125
    %v404 = vmul.f32 %v378, 0.03125
    %v405 = vmul.f32 %v380, 0.03125
    %v406 = vmul.f32 %v382, 0.03125
    %v407 = vmul.f32 %v384, 0.03125
    %v408 = vmul.f32 %v386, 0.03125
    %v409 = vmul.f32 %v388, 0.03125
    %v410 = vmul.f32 %v390, 0.03125
    %v411 = vmul.f32 %v392, 0.03125
    %v412 = vmul.f32 %v394, 0.03125
    %v413 = vmul.f32 %v396, 0.03125
    %v414 = vmul.f32 %v398, 0.03125
    %v415 = vsub.f32 %v351, %v399
    %v416 = vsub.f32 %v352, %v400
    %v417 = vsub.f32 %v353, %v401
    %v418 = vsub.f32 %v354, %v402
    %v419 = vsub.f32 %v355, %v403
    %v420 = vsub.f32 %v356, %v404
    %v421 = vsub.f32 %v357, %v405
    %v422 = vsub.f32 %v358, %v406
    %v423 = vsub.f32 %v359, %v407
    %v424 = vsub.f32 %v360, %v408
    %v425 = vsub.f32 %v361, %v409
    %v426 = vsub.f32 %v362, %v410
    %v427 = vsub.f32 %v363, %v411
    %v428 = vsub.f32 %v364, %v412
    %v429 = vsub.f32 %v365, %v413
    %v430 = vsub.f32 %v366, %v414
    %v431 = vlaneseq
    %v432 = vand.u32 %v431, 127
    %vm433 = vcmp.lt.s32.totalorder %v432, 32
    %v434 = vsel %vm433, 1, 0
    %v435 = vcvt.s32.f32 %v434
    %v436 = vmul.f32 %v415, %v435
    %v437 = vmul.f32 %v416, %v435
    %v438 = vmul.f32 %v417, %v435
    %v439 = vmul.f32 %v418, %v435
    %v440 = vmul.f32 %v419, %v435
    %v441 = vmul.f32 %v420, %v435
    %v442 = vmul.f32 %v421, %v435
    %v443 = vmul.f32 %v422, %v435
    %v444 = vmul.f32 %v423, %v435
    %v445 = vmul.f32 %v424, %v435
    %v446 = vmul.f32 %v425, %v435
    %v447 = vmul.f32 %v426, %v435
    %v448 = vmul.f32 %v427, %v435
    %v449 = vmul.f32 %v428, %v435
    %v450 = vmul.f32 %v429, %v435
    %v451 = vmul.f32 %v430, %v435
    %v452 = vmul.f32 %v436, %v436
    %v453 = vmul.f32 %v437, %v437
    %v454 = vmul.f32 %v438, %v438
    %v455 = vmul.f32 %v439, %v439
    %v456 = vmul.f32 %v440, %v440
    %v457 = vmul.f32 %v441, %v441
    %v458 = vmul.f32 %v442, %v442
    %v459 = vmul.f32 %v443, %v443
    %v460 = vmul.f32 %v444, %v444
    %v461 = vmul.f32 %v445, %v445
    %v462 = vmul.f32 %v446, %v446
    %v463 = vmul.f32 %v447, %v447
    %v464 = vmul.f32 %v448, %v448
    %v465 = vmul.f32 %v449, %v449
    %v466 = vmul.f32 %v450, %v450
    %v467 = vmul.f32 %v451, %v451
    %468 = vadd.xlane.f32.xlu0 %v452
    %v469 = vpop.xlane.xlu0 %468
    %470 = vadd.xlane.f32.xlu0 %v453
    %v471 = vpop.xlane.xlu0 %470
    %472 = vadd.xlane.f32.xlu0 %v454
    %v473 = vpop.xlane.xlu0 %472
    %474 = vadd.xlane.f32.xlu0 %v455
    %v475 = vpop.xlane.xlu0 %474
    %476 = vadd.xlane.f32.xlu0 %v456
    %v477 = vpop.xlane.xlu0 %476
    %478 = vadd.xlane.f32.xlu0 %v457
    %v479 = vpop.xlane.xlu0 %478
    %480 = vadd.xlane.f32.xlu0 %v458
    %v481 = vpop.xlane.xlu0 %480
    %482 = vadd.xlane.f32.xlu0 %v459
    %v483 = vpop.xlane.xlu0 %482
    %484 = vadd.xlane.f32.xlu0 %v460
    %v485 = vpop.xlane.xlu0 %484
    %486 = vadd.xlane.f32.xlu0 %v461
    %v487 = vpop.xlane.xlu0 %486
    %488 = vadd.xlane.f32.xlu0 %v462
    %v489 = vpop.xlane.xlu0 %488
    %490 = vadd.xlane.f32.xlu0 %v463
    %v491 = vpop.xlane.xlu0 %490
    %492 = vadd.xlane.f32.xlu0 %v464
    %v493 = vpop.xlane.xlu0 %492
    %494 = vadd.xlane.f32.xlu0 %v465
    %v495 = vpop.xlane.xlu0 %494
    %496 = vadd.xlane.f32.xlu0 %v466
    %v497 = vpop.xlane.xlu0 %496
    %498 = vadd.xlane.f32.xlu0 %v467
    %v499 = vpop.xlane.xlu0 %498
    %v500 = vmul.f32 %v469, 0.03125
    %v501 = vmul.f32 %v471, 0.03125
    %v502 = vmul.f32 %v473, 0.03125
    %v503 = vmul.f32 %v475, 0.03125
    %v504 = vmul.f32 %v477, 0.03125
    %v505 = vmul.f32 %v479, 0.03125
    %v506 = vmul.f32 %v481, 0.03125
    %v507 = vmul.f32 %v483, 0.03125
    %v508 = vmul.f32 %v485, 0.03125
    %v509 = vmul.f32 %v487, 0.03125
    %v510 = vmul.f32 %v489, 0.03125
    %v511 = vmul.f32 %v491, 0.03125
    %v512 = vmul.f32 %v493, 0.03125
    %v513 = vmul.f32 %v495, 0.03125
    %v514 = vmul.f32 %v497, 0.03125
    %v515 = vmul.f32 %v499, 0.03125
    %v516 = vadd.f32 %v500, 1e-08
    %v517 = vadd.f32 %v501, 1e-08
    %v518 = vadd.f32 %v502, 1e-08
    %v519 = vadd.f32 %v503, 1e-08
    %v520 = vadd.f32 %v504, 1e-08
    %v521 = vadd.f32 %v505, 1e-08
    %v522 = vadd.f32 %v506, 1e-08
    %v523 = vadd.f32 %v507, 1e-08
    %v524 = vadd.f32 %v508, 1e-08
    %v525 = vadd.f32 %v509, 1e-08
    %v526 = vadd.f32 %v510, 1e-08
    %v527 = vadd.f32 %v511, 1e-08
    %v528 = vadd.f32 %v512, 1e-08
    %v529 = vadd.f32 %v513, 1e-08
    %v530 = vadd.f32 %v514, 1e-08
    %v531 = vadd.f32 %v515, 1e-08
    %v532 = vrsqrt.pop %v516
    %v533 = vmul.f32 %v532, %v516
    %v534 = vmul.f32 %v533, %v532
    %v535 = vmul.f32 0.5, %v534
    %v536 = vsub.f32 1.5, %v535
    %v537 = vmul.f32 %v532, %v536
    %vm538 = vweird.f32 %v516
    %vm539 = vweird.f32 %v532
    %vm540 = vmor %vm538, %vm539
    %v541 = vsel %vm540, %v532, %v537
    %v542 = vrsqrt.pop %v517
    %v543 = vmul.f32 %v542, %v517
    %v544 = vmul.f32 %v543, %v542
    %v545 = vmul.f32 0.5, %v544
    %v546 = vsub.f32 1.5, %v545
    %v547 = vmul.f32 %v542, %v546
    %vm548 = vweird.f32 %v517
    %vm549 = vweird.f32 %v542
    %vm550 = vmor %vm548, %vm549
    %v551 = vsel %vm550, %v542, %v547
    %v552 = vrsqrt.pop %v518
    %v553 = vmul.f32 %v552, %v518
    %v554 = vmul.f32 %v553, %v552
    %v555 = vmul.f32 0.5, %v554
    %v556 = vsub.f32 1.5, %v555
    %v557 = vmul.f32 %v552, %v556
    %vm558 = vweird.f32 %v518
    %vm559 = vweird.f32 %v552
    %vm560 = vmor %vm558, %vm559
    %v561 = vsel %vm560, %v552, %v557
    %v562 = vrsqrt.pop %v519
    %v563 = vmul.f32 %v562, %v519
    %v564 = vmul.f32 %v563, %v562
    %v565 = vmul.f32 0.5, %v564
    %v566 = vsub.f32 1.5, %v565
    %v567 = vmul.f32 %v562, %v566
    %vm568 = vweird.f32 %v519
    %vm569 = vweird.f32 %v562
    %vm570 = vmor %vm568, %vm569
    %v571 = vsel %vm570, %v562, %v567
    %v572 = vrsqrt.pop %v520
    %v573 = vmul.f32 %v572, %v520
    %v574 = vmul.f32 %v573, %v572
    %v575 = vmul.f32 0.5, %v574
    %v576 = vsub.f32 1.5, %v575
    %v577 = vmul.f32 %v572, %v576
    %vm578 = vweird.f32 %v520
    %vm579 = vweird.f32 %v572
    %vm580 = vmor %vm578, %vm579
    %v581 = vsel %vm580, %v572, %v577
    %v582 = vrsqrt.pop %v521
    %v583 = vmul.f32 %v582, %v521
    %v584 = vmul.f32 %v583, %v582
    %v585 = vmul.f32 0.5, %v584
    %v586 = vsub.f32 1.5, %v585
    %v587 = vmul.f32 %v582, %v586
    %vm588 = vweird.f32 %v521
    %vm589 = vweird.f32 %v582
    %vm590 = vmor %vm588, %vm589
    %v591 = vsel %vm590, %v582, %v587
    %v592 = vrsqrt.pop %v522
    %v593 = vmul.f32 %v592, %v522
    %v594 = vmul.f32 %v593, %v592
    %v595 = vmul.f32 0.5, %v594
    %v596 = vsub.f32 1.5, %v595
    %v597 = vmul.f32 %v592, %v596
    %vm598 = vweird.f32 %v522
    %vm599 = vweird.f32 %v592
    %vm600 = vmor %vm598, %vm599
    %v601 = vsel %vm600, %v592, %v597
    %v602 = vrsqrt.pop %v523
    %v603 = vmul.f32 %v602, %v523
    %v604 = vmul.f32 %v603, %v602
    %v605 = vmul.f32 0.5, %v604
    %v606 = vsub.f32 1.5, %v605
    %v607 = vmul.f32 %v602, %v606
    %vm608 = vweird.f32 %v523
    %vm609 = vweird.f32 %v602
    %vm610 = vmor %vm608, %vm609
    %v611 = vsel %vm610, %v602, %v607
    %v612 = vrsqrt.pop %v524
    %v613 = vmul.f32 %v612, %v524
    %v614 = vmul.f32 %v613, %v612
    %v615 = vmul.f32 0.5, %v614
    %v616 = vsub.f32 1.5, %v615
    %v617 = vmul.f32 %v612, %v616
    %vm618 = vweird.f32 %v524
    %vm619 = vweird.f32 %v612
    %vm620 = vmor %vm618, %vm619
    %v621 = vsel %vm620, %v612, %v617
    %v622 = vrsqrt.pop %v525
    %v623 = vmul.f32 %v622, %v525
    %v624 = vmul.f32 %v623, %v622
    %v625 = vmul.f32 0.5, %v624
    %v626 = vsub.f32 1.5, %v625
    %v627 = vmul.f32 %v622, %v626
    %vm628 = vweird.f32 %v525
    %vm629 = vweird.f32 %v622
    %vm630 = vmor %vm628, %vm629
    %v631 = vsel %vm630, %v622, %v627
    %v632 = vrsqrt.pop %v526
    %v633 = vmul.f32 %v632, %v526
    %v634 = vmul.f32 %v633, %v632
    %v635 = vmul.f32 0.5, %v634
    %v636 = vsub.f32 1.5, %v635
    %v637 = vmul.f32 %v632, %v636
    %vm638 = vweird.f32 %v526
    %vm639 = vweird.f32 %v632
    %vm640 = vmor %vm638, %vm639
    %v641 = vsel %vm640, %v632, %v637
    %v642 = vrsqrt.pop %v527
    %v643 = vmul.f32 %v642, %v527
    %v644 = vmul.f32 %v643, %v642
    %v645 = vmul.f32 0.5, %v644
    %v646 = vsub.f32 1.5, %v645
    %v647 = vmul.f32 %v642, %v646
    %vm648 = vweird.f32 %v527
    %vm649 = vweird.f32 %v642
    %vm650 = vmor %vm648, %vm649
    %v651 = vsel %vm650, %v642, %v647
    %v652 = vrsqrt.pop %v528
    %v653 = vmul.f32 %v652, %v528
    %v654 = vmul.f32 %v653, %v652
    %v655 = vmul.f32 0.5, %v654
    %v656 = vsub.f32 1.5, %v655
    %v657 = vmul.f32 %v652, %v656
    %vm658 = vweird.f32 %v528
    %vm659 = vweird.f32 %v652
    %vm660 = vmor %vm658, %vm659
    %v661 = vsel %vm660, %v652, %v657
    %v662 = vrsqrt.pop %v529
    %v663 = vmul.f32 %v662, %v529
    %v664 = vmul.f32 %v663, %v662
    %v665 = vmul.f32 0.5, %v664
    %v666 = vsub.f32 1.5, %v665
    %v667 = vmul.f32 %v662, %v666
    %vm668 = vweird.f32 %v529
    %vm669 = vweird.f32 %v662
    %vm670 = vmor %vm668, %vm669
    %v671 = vsel %vm670, %v662, %v667
    %v672 = vrsqrt.pop %v530
    %v673 = vmul.f32 %v672, %v530
    %v674 = vmul.f32 %v673, %v672
    %v675 = vmul.f32 0.5, %v674
    %v676 = vsub.f32 1.5, %v675
    %v677 = vmul.f32 %v672, %v676
    %vm678 = vweird.f32 %v530
    %vm679 = vweird.f32 %v672
    %vm680 = vmor %vm678, %vm679
    %v681 = vsel %vm680, %v672, %v677
    %v682 = vrsqrt.pop %v531
    %v683 = vmul.f32 %v682, %v531
    %v684 = vmul.f32 %v683, %v682
    %v685 = vmul.f32 0.5, %v684
    %v686 = vsub.f32 1.5, %v685
    %v687 = vmul.f32 %v682, %v686
    %vm688 = vweird.f32 %v531
    %vm689 = vweird.f32 %v682
    %vm690 = vmor %vm688, %vm689
    %v691 = vsel %vm690, %v682, %v687
    %v692 = vmul.f32 %v436, %v541
    %v693 = vmul.f32 %v437, %v551
    %v694 = vmul.f32 %v438, %v561
    %v695 = vmul.f32 %v439, %v571
    %v696 = vmul.f32 %v440, %v581
    %v697 = vmul.f32 %v441, %v591
    %v698 = vmul.f32 %v442, %v601
    %v699 = vmul.f32 %v443, %v611
    %v700 = vmul.f32 %v444, %v621
    %v701 = vmul.f32 %v445, %v631
    %v702 = vmul.f32 %v446, %v641
    %v703 = vmul.f32 %v447, %v651
    %v704 = vmul.f32 %v448, %v661
    %v705 = vmul.f32 %v449, %v671
    %v706 = vmul.f32 %v450, %v681
    %v707 = vmul.f32 %v451, %v691
    %v709 = vperm.slane %v233, 0
    %v711 = vmul.f32 %v692, %v709
    %v712 = vmul.f32 %v693, %v709
    %v713 = vmul.f32 %v694, %v709
    %v714 = vmul.f32 %v695, %v709
    %v715 = vmul.f32 %v696, %v709
    %v716 = vmul.f32 %v697, %v709
    %v717 = vmul.f32 %v698, %v709
    %v718 = vmul.f32 %v699, %v709
    %v719 = vmul.f32 %v700, %v709
    %v720 = vmul.f32 %v701, %v709
    %v721 = vmul.f32 %v702, %v709
    %v722 = vmul.f32 %v703, %v709
    %v723 = vmul.f32 %v704, %v709
    %v724 = vmul.f32 %v705, %v709
    %v725 = vmul.f32 %v706, %v709
    %v726 = vmul.f32 %v707, %v709
    %v728 = vperm.slane %v234, 0
    %v730 = vadd.f32 %v711, %v728
    %v731 = vadd.f32 %v712, %v728
    %v732 = vadd.f32 %v713, %v728
    %v733 = vadd.f32 %v714, %v728
    %v734 = vadd.f32 %v715, %v728
    %v735 = vadd.f32 %v716, %v728
    %v736 = vadd.f32 %v717, %v728
    %v737 = vadd.f32 %v718, %v728
    %v738 = vadd.f32 %v719, %v728
    %v739 = vadd.f32 %v720, %v728
    %v740 = vadd.f32 %v721, %v728
    %v741 = vadd.f32 %v722, %v728
    %v742 = vadd.f32 %v723, %v728
    %v743 = vadd.f32 %v724, %v728
    %v744 = vadd.f32 %v725, %v728
    %v745 = vadd.f32 %v726, %v728
    %746 = vst [vmem:[#allocation8] sm:$0xff] %v730
    %747 = vst [vmem:[#allocation8 + $0x8] sm:$0xff] %v731
    %748 = vst [vmem:[#allocation8 + $0x10] sm:$0xff] %v732
    %749 = vst [vmem:[#allocation8 + $0x18] sm:$0xff] %v733
    %750 = vst [vmem:[#allocation8 + $0x20] sm:$0xff] %v734
    %751 = vst [vmem:[#allocation8 + $0x28] sm:$0xff] %v735
    %752 = vst [vmem:[#allocation8 + $0x30] sm:$0xff] %v736
    %753 = vst [vmem:[#allocation8 + $0x38] sm:$0xff] %v737
    %754 = vst [vmem:[#allocation8 + $0x40] sm:$0xff] %v738
    %755 = vst [vmem:[#allocation8 + $0x48] sm:$0xff] %v739
    %756 = vst [vmem:[#allocation8 + $0x50] sm:$0xff] %v740
    %757 = vst [vmem:[#allocation8 + $0x58] sm:$0xff] %v741
    %758 = vst [vmem:[#allocation8 + $0x60] sm:$0xff] %v742
    %759 = vst [vmem:[#allocation8 + $0x68] sm:$0xff] %v743
    %760 = vst [vmem:[#allocation8 + $0x70] sm:$0xff] %v744
    %761 = vst [vmem:[#allocation8 + $0x78] sm:$0xff] %v745
    // Predicated region
    $region38: #{tpu_custom_call.1} parent=1 // pred_check
      _
    $region39: #{tpu_custom_call.1} parent=1 // pred_check_branch
      %763 = sbr.rel (0) target = $region41
    $region40: #{tpu_custom_call.1} parent=1 // pred_region
      %765 = vsyncadd [#allocation4], 0
      %s766 = sshll.u32 [#allocation8], 4
      %s767 = int_to_ptr.vmem [resolvable:$true] %s766
      %s768 = sshll.u32 %s6, 4
      %s769 = int_to_ptr.hbm [resolvable:$true] %s768
      %774 = dma.vmem_to_hbm [thread:$0]  %s767, 2048, %s769, [#allocation4], 128, 128, 8
    $region41: #{tpu_custom_call.1} parent=1 // pred_fallthru
      _
    // Predicated region
    $region42: #{tpu_custom_call.1} parent=1 // pred_check
      _
    $region43: #{tpu_custom_call.1} parent=1 // pred_check_branch
      %776 = sbr.rel (0) target = $region45
    $region44: #{tpu_custom_call.1} parent=1 // pred_region
      %778 = dma.done [#allocation4], 2048
    $region45: #{tpu_custom_call.1} parent=1 // pred_fallthru
      _
    %779 = vsyncpa [#allocation3], 1
    %780 = vsyncpa [#allocation6], 1
    %781 = vsyncpa [#allocation4], 1

</llo_original>
